<compile_context>
chip_gen: v5e
topology: v5e:2x2
jax: 0.10.0
libtpu: 0.0.40
codegen_flags: <defaults>
</compile_context>

<pallas_src>
import jax
import jax.numpy as jnp
from jax.experimental import pallas as pl
from jax.experimental.pallas import tpu as pltpu


def _perm_inv_kernel(im_ref, s_ref, out_ref):
    """One grid step handles Bt batch elements; writes per-element losses."""
    im = im_ref[...]          # (Bt, N, D) original dtype (bf16 ok for the MXU)
    s = s_ref[...]            # (Bt, M, D)

    imf = im.astype(jnp.float32)
    sf = s.astype(jnp.float32)

    # Pairwise euclidean distances via ||a||^2 + ||b||^2 - 2 a.b.
    # Contract on D directly (batched) — no transpose of s needed.
    gram = jax.lax.dot_general(
        im, s,
        dimension_numbers=(((2,), (2,)), ((0,), (0,))),
        preferred_element_type=jnp.float32,
    )                                                           # (Bt, N, M)
    im_sq = jnp.sum(imf * imf, axis=2, keepdims=True)           # (Bt, N, 1)
    s_sq = jnp.sum(sf * sf, axis=2, keepdims=True)              # (Bt, M, 1)
    s_sq = jnp.swapaxes(s_sq, 1, 2)                             # (Bt, 1, M)
    d2 = jnp.maximum(im_sq + s_sq - 2.0 * gram, 0.0)
    neg = -jnp.sqrt(d2)                                          # (Bt, N, M) = -dist

    # softmin over dim=2, then max over dim=2 == 1 / sum(exp(neg - max(neg)))
    row_m = jnp.max(neg, axis=2, keepdims=True)                  # (Bt, N, 1)
    row_z = jnp.sum(jnp.exp(neg - row_m), axis=2, keepdims=True)  # (Bt, N, 1)
    row_sum = jnp.sum(1.0 / row_z, axis=1)                        # (Bt, 1)

    # softmin over dim=1, then max over dim=1 == 1 / sum(exp(neg - max(neg)))
    col_m = jnp.max(neg, axis=1, keepdims=True)                  # (Bt, 1, M)
    col_z = jnp.sum(jnp.exp(neg - col_m), axis=1, keepdims=True)  # (Bt, 1, M)
    col_sum = jnp.sum(1.0 / col_z, axis=2)                        # (Bt, 1)

    n_pts = im_ref.shape[1]                 # static N == dist_matrix.shape[1]
    loss_b = 2.0 * n_pts - row_sum - col_sum                      # (Bt, 1)
    out_ref[...] = loss_b[None]                                   # (1, Bt, 1)


def _pick_block_b(B, N, M, D, im_dtype, s_dtype):
    """Largest batch tile whose working set fits a conservative VMEM budget."""
    b_im = jnp.dtype(im_dtype).itemsize
    b_s = jnp.dtype(s_dtype).itemsize
    # double-buffered inputs + ~4 f32 (N,M)-sized intermediates + norm vectors
    per_b = 2 * (N * D * b_im + M * D * b_s) + 4 * N * M * 4 + 4 * (N + M) * 4
    budget = 24 * 1024 * 1024   # conservative across v5e/v6e/v7x scoped VMEM
    bt = max(1, budget // max(per_b, 1))
    return int(min(bt, 64, B)), per_b


def perm_inv_matching_loss(im, s, *, block_b=None):
    B, N, D = im.shape
    Bs, M, Ds = s.shape
    assert B == Bs and D == Ds

    auto_bt, per_b = _pick_block_b(B, N, M, D, im.dtype, s.dtype)
    if block_b is None:
        block_b = auto_bt
    block_b = int(min(block_b, B))

    nb = pl.cdiv(B, block_b)
    b_pad = nb * block_b
    if b_pad != B:
        # Padded batch entries compute harmless finite values and are dropped.
        im = jnp.pad(im, ((0, b_pad - B), (0, 0), (0, 0)))
        s = jnp.pad(s, ((0, b_pad - B), (0, 0), (0, 0)))

    vmem_limit = int(min(64 * 1024 * 1024,
                         max(32 * 1024 * 1024, 3 * per_b * block_b)))

    out = pl.pallas_call(
        _perm_inv_kernel,
        out_shape=jax.ShapeDtypeStruct((nb, block_b, 1), jnp.float32),
        grid_spec=pltpu.PrefetchScalarGridSpec(
            num_scalar_prefetch=0,
            grid=(nb,),
            in_specs=[
                pl.BlockSpec((block_b, N, D), lambda b: (b, 0, 0)),
                pl.BlockSpec((block_b, M, D), lambda b: (b, 0, 0)),
            ],
            out_specs=pl.BlockSpec((1, block_b, 1), lambda b: (b, 0, 0)),
        ),
        compiler_params=pltpu.CompilerParams(
            dimension_semantics=("parallel",),   # independent per-block partials
            vmem_limit_bytes=vmem_limit,
        ),
    )(im, s)

    per_elem = out.reshape(-1)[:B]
    return jnp.mean(per_elem)


def _reference_loss(im, s):
    """Pure-JAX reference mirroring the PyTorch module."""
    diff = im[:, :, None, :] - s[:, None, :, :]
    dist = jnp.sqrt(jnp.sum(diff * diff, axis=-1))                      # (B,N,M)
    row_sum = jnp.sum(jnp.max(jax.nn.softmax(-dist, axis=2), axis=2), axis=1)
    col_sum = jnp.sum(jnp.max(jax.nn.softmax(-dist, axis=1), axis=1), axis=1)
    loss = 2.0 * dist.shape[1] - row_sum - col_sum
    return jnp.mean(loss)


if __name__ == "__main__":
    key = jax.random.PRNGKey(0)
    k1, k2 = jax.random.split(key)
    B, N, M, D = 6, 8, 16, 32
    im = jax.random.normal(k1, (B, N, D), dtype=jnp.float32)
    s = jax.random.normal(k2, (B, M, D), dtype=jnp.float32)

    ref = _reference_loss(im, s)

    # Auto-chosen batch tile (single grid step at these shapes).
    loss = perm_inv_matching_loss(im, s)
    jax.block_until_ready(loss)
    assert jnp.allclose(loss, ref, rtol=1e-4, atol=1e-4), (loss, ref)

    # Explicit smaller tile to exercise the multi-block + batch-padding path.
    loss2 = perm_inv_matching_loss(im, s, block_b=4)
    jax.block_until_ready(loss2)
    assert jnp.allclose(loss2, ref, rtol=1e-4, atol=1e-4), (loss2, ref)

    print("KERNEL_OK")
</pallas_src>

<mosaic_0001>
module attributes {stable_mosaic.version = 11 : i64} {
  func.func @_perm_inv_kernel(%arg0: i32, %arg1: memref<6x8x32xf32, #tpu.memory_space<vmem>>, %arg2: memref<6x16x32xf32, #tpu.memory_space<vmem>>, %arg3: memref<1x6x1xf32, #tpu.memory_space<vmem>>) attributes {dimension_semantics = [#tpu.dimension_semantics<parallel>], iteration_bounds = array<i64: 1>, scalar_prefetch = 0 : i64, scratch_operands = 0 : i64, tpu.core_type = #tpu.core_type<tc>, window_params = [{transform_indices = @transform_0, window_bounds = array<i64: 6, 8, 32>}, {transform_indices = @transform_1, window_bounds = array<i64: 6, 16, 32>}, {transform_indices = @transform_2, window_bounds = array<i64: 1, 6, 1>}]} {
    %c0 = arith.constant 0 : index
    %c0_0 = arith.constant 0 : index
    %c0_1 = arith.constant 0 : index
    %0 = vector.load %arg1[%c0, %c0_0, %c0_1] : memref<6x8x32xf32, #tpu.memory_space<vmem>>, vector<6x8x32xf32>
    %c0_2 = arith.constant 0 : index
    %c0_3 = arith.constant 0 : index
    %c0_4 = arith.constant 0 : index
    %1 = vector.load %arg2[%c0_2, %c0_3, %c0_4] : memref<6x16x32xf32, #tpu.memory_space<vmem>>, vector<6x16x32xf32>
    %cst = arith.constant dense<0.000000e+00> : vector<6x8x16xf32>
    %2 = tpu.matmul %0, %1, %cst {dimension_numbers = #tpu.dot_dimension_numbers<[2], [2], [1], [1], [0, 0, 0, 1, 1, 1], [0], [0]>} : vector<6x8x32xf32>, vector<6x16x32xf32>, vector<6x8x16xf32> -> vector<6x8x16xf32>
    %3 = arith.mulf %0, %0 : vector<6x8x32xf32>
    %cst_5 = arith.constant dense<0.000000e+00> : vector<6x8xf32>
    %4 = vector.multi_reduction <add>, %3, %cst_5 [2] : vector<6x8x32xf32> to vector<6x8xf32>
    %5 = vector.shape_cast %4 : vector<6x8xf32> to vector<6x8x1xf32>
    %6 = arith.mulf %1, %1 : vector<6x16x32xf32>
    %cst_6 = arith.constant dense<0.000000e+00> : vector<6x16xf32>
    %7 = vector.multi_reduction <add>, %6, %cst_6 [2] : vector<6x16x32xf32> to vector<6x16xf32>
    %8 = vector.shape_cast %7 : vector<6x16xf32> to vector<6x16x1xf32>
    %9 = tpu.transpose %8, [0, 2, 1] : vector<6x16x1xf32> -> vector<6x1x16xf32>
    %10 = vector.broadcast %5 : vector<6x8x1xf32> to vector<6x8x16xf32>
    %11 = vector.broadcast %9 : vector<6x1x16xf32> to vector<6x8x16xf32>
    %12 = arith.addf %10, %11 : vector<6x8x16xf32>
    %cst_7 = arith.constant 2.000000e+00 : f32
    %13 = vector.broadcast %cst_7 : f32 to vector<6x8x16xf32>
    %14 = arith.mulf %13, %2 : vector<6x8x16xf32>
    %15 = arith.subf %12, %14 : vector<6x8x16xf32>
    %cst_8 = arith.constant 0.000000e+00 : f32
    %16 = vector.broadcast %cst_8 : f32 to vector<6x8x16xf32>
    %17 = arith.maximumf %15, %16 : vector<6x8x16xf32>
    %18 = math.sqrt %17 : vector<6x8x16xf32>
    %cst_9 = arith.constant 0.000000e+00 : f32
    %19 = vector.broadcast %cst_9 : f32 to vector<6x8x16xf32>
    %20 = arith.subf %19, %18 : vector<6x8x16xf32>
    %cst_10 = arith.constant dense<0xFF800000> : vector<6x8xf32>
    %21 = vector.multi_reduction <maximumf>, %20, %cst_10 [2] : vector<6x8x16xf32> to vector<6x8xf32>
    %22 = vector.shape_cast %21 : vector<6x8xf32> to vector<6x8x1xf32>
    %23 = vector.broadcast %22 : vector<6x8x1xf32> to vector<6x8x16xf32>
    %24 = arith.subf %20, %23 : vector<6x8x16xf32>
    %25 = math.exp %24 : vector<6x8x16xf32>
    %cst_11 = arith.constant dense<0.000000e+00> : vector<6x8xf32>
    %26 = vector.multi_reduction <add>, %25, %cst_11 [2] : vector<6x8x16xf32> to vector<6x8xf32>
    %27 = vector.shape_cast %26 : vector<6x8xf32> to vector<6x8x1xf32>
    %cst_12 = arith.constant 1.000000e+00 : f32
    %28 = vector.broadcast %cst_12 : f32 to vector<6x8x1xf32>
    %29 = arith.divf %28, %27 : vector<6x8x1xf32>
    %cst_13 = arith.constant dense<0.000000e+00> : vector<6x1xf32>
    %30 = vector.multi_reduction <add>, %29, %cst_13 [1] : vector<6x8x1xf32> to vector<6x1xf32>
    %cst_14 = arith.constant dense<0xFF800000> : vector<6x16xf32>
    %31 = vector.multi_reduction <maximumf>, %20, %cst_14 [1] : vector<6x8x16xf32> to vector<6x16xf32>
    %32 = vector.shape_cast %31 : vector<6x16xf32> to vector<6x1x16xf32>
    %33 = vector.broadcast %32 : vector<6x1x16xf32> to vector<6x8x16xf32>
    %34 = arith.subf %20, %33 : vector<6x8x16xf32>
    %35 = math.exp %34 : vector<6x8x16xf32>
    %cst_15 = arith.constant dense<0.000000e+00> : vector<6x16xf32>
    %36 = vector.multi_reduction <add>, %35, %cst_15 [1] : vector<6x8x16xf32> to vector<6x16xf32>
    %37 = vector.shape_cast %36 : vector<6x16xf32> to vector<6x1x16xf32>
    %cst_16 = arith.constant 1.000000e+00 : f32
    %38 = vector.broadcast %cst_16 : f32 to vector<6x1x16xf32>
    %39 = arith.divf %38, %37 : vector<6x1x16xf32>
    %cst_17 = arith.constant dense<0.000000e+00> : vector<6x1xf32>
    %40 = vector.multi_reduction <add>, %39, %cst_17 [2] : vector<6x1x16xf32> to vector<6x1xf32>
    %cst_18 = arith.constant 1.600000e+01 : f32
    %41 = vector.broadcast %cst_18 : f32 to vector<6x1xf32>
    %42 = arith.subf %41, %30 : vector<6x1xf32>
    %43 = arith.subf %42, %40 : vector<6x1xf32>
    %44 = vector.shape_cast %43 : vector<6x1xf32> to vector<1x6x1xf32>
    %c0_19 = arith.constant 0 : index
    %c0_20 = arith.constant 0 : index
    %c0_21 = arith.constant 0 : index
    %45 = vector.load %arg3[%c0_19, %c0_20, %c0_21] : memref<1x6x1xf32, #tpu.memory_space<vmem>>, vector<1x6x1xf32>
    tpu.vector_store %arg3[%c0_19, %c0_20, %c0_21], %44 {strides = array<i32>} : memref<1x6x1xf32, #tpu.memory_space<vmem>>, vector<1x6x1xf32>,
    return
  }
  func.func @transform_0(%arg0: i32) -> (i32, i32, i32) {
    %c0_i32 = arith.constant 0 : i32
    %c0_i32_0 = arith.constant 0 : i32
    %c0_i32_1 = arith.constant 0 : i32
    return %arg0, %c0_i32, %c0_i32_0 : i32, i32, i32
  }
  func.func @transform_1(%arg0: i32) -> (i32, i32, i32) {
    %c0_i32 = arith.constant 0 : i32
    %c0_i32_0 = arith.constant 0 : i32
    %c0_i32_1 = arith.constant 0 : i32
    return %arg0, %c0_i32, %c0_i32_0 : i32, i32, i32
  }
  func.func @transform_2(%arg0: i32) -> (i32, i32, i32) {
    %c0_i32 = arith.constant 0 : i32
    %c0_i32_0 = arith.constant 0 : i32
    %c0_i32_1 = arith.constant 0 : i32
    return %arg0, %c0_i32, %c0_i32_0 : i32, i32, i32
  }
}

</mosaic_0001>

<llo_original>
// kernel: tpu_custom_call.1
$region0: #{tpu_custom_call.1}
  #allocation0 [shape = 'u32[]', space=smem, size = 0x4, offset = 0x4, fixed_abs, tag = 'smem constant byte address 0x4 - core index']
  #allocation1 [shape = 'u32[72,128]{1,0:T(1,128)}', space=vmem, size = 0x9000, scoped, tag = 'internal scratch']
  %s0 = inlined_call_operand.hbm [shape: f32[6,8,32], index: 0, kind: input, shape index: {}]
  %s1 = inlined_call_operand.hbm [shape: f32[6,16,32], index: 1, kind: input, shape index: {}]
  %s2 = inlined_call_operand.vmem [shape: f32[1,6,1], index: 2, kind: output, shape index: {}]
  %s3 = sld [smem:[#allocation0]]
  $region26: #{tpu_custom_call.1} parent=0
    _
  %s5 = ssub.s32 1, %s3
  %s6 = scalar_select 0, %s5, %s3
  $region1: #{tpu_custom_call.1} parent=0
    #allocation2 [shape = 'u8[24576]{0}', space=vmem, size = 0x6000, scoped, tag = 'input window, operand 0, single buffered']
    #allocation3 [shape = 's32[1]{0}', space=sflag, size = 0x4, scoped, tag = 'scoped memory for tpu_custom_call.1']
    #allocation4 [shape = 'u8[49152]{0}', space=vmem, size = 0xc000, scoped, tag = 'input window, operand 1, single buffered']
    #allocation5 [shape = 's32[1]{0}', space=sflag, size = 0x4, scoped, tag = 'scoped memory for tpu_custom_call.1']
    %7 = vsyncpa [#allocation3], 0
    %8 = vsyncpa [#allocation5], 0
    // Predicated region
    $region2: #{tpu_custom_call.1} parent=1 // pred_check
      _
    $region3: #{tpu_custom_call.1} parent=1 // pred_check_branch
      %10 = sbr.rel (0) target = $region5
    $region4: #{tpu_custom_call.1} parent=1 // pred_region
      %12 = vsyncadd [#allocation3], 0
      %s13 = sshll.u32 %s0, 4
      %s14 = int_to_ptr.hbm [resolvable:$true] %s13
      %s15 = sshll.u32 [#allocation2], 4
      %s16 = int_to_ptr.vmem [resolvable:$true] %s15
      %21 = dma.hbm_to_vmem [thread:$0]  %s14, 768, %s16, [#allocation3], 128, 128, 8
    $region5: #{tpu_custom_call.1} parent=1 // pred_fallthru
      _
    // Predicated region
    $region6: #{tpu_custom_call.1} parent=1 // pred_check
      _
    $region7: #{tpu_custom_call.1} parent=1 // pred_check_branch
      %23 = sbr.rel (0) target = $region9
    $region8: #{tpu_custom_call.1} parent=1 // pred_region
      %25 = vsyncadd [#allocation5], 0
      %s26 = sshll.u32 %s1, 4
      %s27 = int_to_ptr.hbm [resolvable:$true] %s26
      %s28 = sshll.u32 [#allocation4], 4
      %s29 = int_to_ptr.vmem [resolvable:$true] %s28
      %34 = dma.hbm_to_vmem [thread:$0]  %s27, 1536, %s29, [#allocation5], 128, 128, 8
    $region9: #{tpu_custom_call.1} parent=1 // pred_fallthru
      _
    // Predicated region
    $region10: #{tpu_custom_call.1} parent=1 // pred_check
      _
    $region11: #{tpu_custom_call.1} parent=1 // pred_check_branch
      %36 = sbr.rel (0) target = $region13
    $region12: #{tpu_custom_call.1} parent=1 // pred_region
      %38 = dma.done [#allocation3], 768
    $region13: #{tpu_custom_call.1} parent=1 // pred_fallthru
      _
    // Predicated region
    $region14: #{tpu_custom_call.1} parent=1 // pred_check
      _
    $region15: #{tpu_custom_call.1} parent=1 // pred_check_branch
      %40 = sbr.rel (0) target = $region17
    $region16: #{tpu_custom_call.1} parent=1 // pred_region
      %42 = dma.done [#allocation5], 1536
    $region17: #{tpu_custom_call.1} parent=1 // pred_fallthru
      _
    %v43 = vld [vmem:[#allocation2] sm:$0xff]
    %v44 = vld [vmem:[#allocation2 + $0x8] sm:$0xff]
    %v45 = vld [vmem:[#allocation2 + $0x10] sm:$0xff]
    %v46 = vld [vmem:[#allocation2 + $0x18] sm:$0xff]
    %v47 = vld [vmem:[#allocation2 + $0x20] sm:$0xff]
    %v48 = vld [vmem:[#allocation2 + $0x28] sm:$0xff]
    %v49 = vld [vmem:[#allocation4] sm:$0xff]
    %v50 = vld [vmem:[#allocation4 + $0x8] sm:$0xff]
    %v51 = vld [vmem:[#allocation4 + $0x10] sm:$0xff]
    %v52 = vld [vmem:[#allocation4 + $0x18] sm:$0xff]
    %v53 = vld [vmem:[#allocation4 + $0x20] sm:$0xff]
    %v54 = vld [vmem:[#allocation4 + $0x28] sm:$0xff]
    %v55 = vld [vmem:[#allocation4 + $0x30] sm:$0xff]
    %v56 = vld [vmem:[#allocation4 + $0x38] sm:$0xff]
    %v57 = vld [vmem:[#allocation4 + $0x40] sm:$0xff]
    %v58 = vld [vmem:[#allocation4 + $0x48] sm:$0xff]
    %v59 = vld [vmem:[#allocation4 + $0x50] sm:$0xff]
    %v60 = vld [vmem:[#allocation4 + $0x58] sm:$0xff]
    %vm61 = vcmask 261120
    %v63 = vsel %vm61, %v43, 0
    %v66 = vsel %vm61, %v49, 0
    %v69 = vsel %vm61, %v50, 0
    %71 = vmatpush.xpose.msra.mxu0 0.0
    %72 = vmatpush.xpose.msra.mxu0 0.0
    %73 = vmatpush.xpose.msra.mxu0 0.0
    %74 = vmatpush.xpose.msra.mxu0 0.0
    %75 = vmatpush.xpose.msra.mxu0 0.0
    %76 = vmatpush.xpose.msra.mxu0 0.0
    %77 = vmatpush.xpose.msra.mxu0 0.0
    %78 = vmatpush.xpose.msra.mxu0 0.0
    %79 = vmatpush.xpose.msra.mxu0 0.0
    %80 = vmatpush.xpose.msra.mxu0 0.0
    %81 = vmatpush.xpose.msra.mxu0 0.0
    %82 = vmatpush.xpose.msra.mxu0 0.0
    %83 = vmatpush.xpose.msra.mxu0 0.0
    %84 = vmatpush.xpose.msra.mxu0 0.0
    %85 = vmatpush.xpose.msra.mxu0 %v69
    %86 = vmatpush.xpose.msra.mxu0 %v66
    %87 = vmatmul.f32.gmra.mxu0 %v63
    %v88 = vpop.f32.mrf.mxu0
    %v89 = vadd.f32 0.0, %v88
    %90 = vdwg.mxu0
    %v92 = vsel %vm61, %v44, 0
    %v95 = vsel %vm61, %v51, 0
    %v98 = vsel %vm61, %v52, 0
    %100 = vmatpush.xpose.msra.mxu0 0.0
    %101 = vmatpush.xpose.msra.mxu0 0.0
    %102 = vmatpush.xpose.msra.mxu0 0.0
    %103 = vmatpush.xpose.msra.mxu0 0.0
    %104 = vmatpush.xpose.msra.mxu0 0.0
    %105 = vmatpush.xpose.msra.mxu0 0.0
    %106 = vmatpush.xpose.msra.mxu0 0.0
    %107 = vmatpush.xpose.msra.mxu0 0.0
    %108 = vmatpush.xpose.msra.mxu0 0.0
    %109 = vmatpush.xpose.msra.mxu0 0.0
    %110 = vmatpush.xpose.msra.mxu0 0.0
    %111 = vmatpush.xpose.msra.mxu0 0.0
    %112 = vmatpush.xpose.msra.mxu0 0.0
    %113 = vmatpush.xpose.msra.mxu0 0.0
    %114 = vmatpush.xpose.msra.mxu0 %v98
    %115 = vmatpush.xpose.msra.mxu0 %v95
    %116 = vmatmul.f32.gmra.mxu0 %v92
    %v117 = vpop.f32.mrf.mxu0
    %v118 = vadd.f32 0.0, %v117
    %119 = vdwg.mxu0
    %v121 = vsel %vm61, %v45, 0
    %v124 = vsel %vm61, %v53, 0
    %v127 = vsel %vm61, %v54, 0
    %129 = vmatpush.xpose.msra.mxu0 0.0
    %130 = vmatpush.xpose.msra.mxu0 0.0
    %131 = vmatpush.xpose.msra.mxu0 0.0
    %132 = vmatpush.xpose.msra.mxu0 0.0
    %133 = vmatpush.xpose.msra.mxu0 0.0
    %134 = vmatpush.xpose.msra.mxu0 0.0
    %135 = vmatpush.xpose.msra.mxu0 0.0
    %136 = vmatpush.xpose.msra.mxu0 0.0
    %137 = vmatpush.xpose.msra.mxu0 0.0
    %138 = vmatpush.xpose.msra.mxu0 0.0
    %139 = vmatpush.xpose.msra.mxu0 0.0
    %140 = vmatpush.xpose.msra.mxu0 0.0
    %141 = vmatpush.xpose.msra.mxu0 0.0
    %142 = vmatpush.xpose.msra.mxu0 0.0
    %143 = vmatpush.xpose.msra.mxu0 %v127
    %144 = vmatpush.xpose.msra.mxu0 %v124
    %145 = vmatmul.f32.gmra.mxu0 %v121
    %v146 = vpop.f32.mrf.mxu0
    %v147 = vadd.f32 0.0, %v146
    %148 = vdwg.mxu0
    %v150 = vsel %vm61, %v46, 0
    %v153 = vsel %vm61, %v55, 0
    %v156 = vsel %vm61, %v56, 0
    %158 = vmatpush.xpose.msra.mxu0 0.0
    %159 = vmatpush.xpose.msra.mxu0 0.0
    %160 = vmatpush.xpose.msra.mxu0 0.0
    %161 = vmatpush.xpose.msra.mxu0 0.0
    %162 = vmatpush.xpose.msra.mxu0 0.0
    %163 = vmatpush.xpose.msra.mxu0 0.0
    %164 = vmatpush.xpose.msra.mxu0 0.0
    %165 = vmatpush.xpose.msra.mxu0 0.0
    %166 = vmatpush.xpose.msra.mxu0 0.0
    %167 = vmatpush.xpose.msra.mxu0 0.0
    %168 = vmatpush.xpose.msra.mxu0 0.0
    %169 = vmatpush.xpose.msra.mxu0 0.0
    %170 = vmatpush.xpose.msra.mxu0 0.0
    %171 = vmatpush.xpose.msra.mxu0 0.0
    %172 = vmatpush.xpose.msra.mxu0 %v156
    %173 = vmatpush.xpose.msra.mxu0 %v153
    %174 = vmatmul.f32.gmra.mxu0 %v150
    %v175 = vpop.f32.mrf.mxu0
    %v176 = vadd.f32 0.0, %v175
    %177 = vdwg.mxu0
    %v179 = vsel %vm61, %v47, 0
    %v182 = vsel %vm61, %v57, 0
    %v185 = vsel %vm61, %v58, 0
    %187 = vmatpush.xpose.msra.mxu0 0.0
    %188 = vmatpush.xpose.msra.mxu0 0.0
    %189 = vmatpush.xpose.msra.mxu0 0.0
    %190 = vmatpush.xpose.msra.mxu0 0.0
    %191 = vmatpush.xpose.msra.mxu0 0.0
    %192 = vmatpush.xpose.msra.mxu0 0.0
    %193 = vmatpush.xpose.msra.mxu0 0.0
    %194 = vmatpush.xpose.msra.mxu0 0.0
    %195 = vmatpush.xpose.msra.mxu0 0.0
    %196 = vmatpush.xpose.msra.mxu0 0.0
    %197 = vmatpush.xpose.msra.mxu0 0.0
    %198 = vmatpush.xpose.msra.mxu0 0.0
    %199 = vmatpush.xpose.msra.mxu0 0.0
    %200 = vmatpush.xpose.msra.mxu0 0.0
    %201 = vmatpush.xpose.msra.mxu0 %v185
    %202 = vmatpush.xpose.msra.mxu0 %v182
    %203 = vmatmul.f32.gmra.mxu0 %v179
    %v204 = vpop.f32.mrf.mxu0
    %v205 = vadd.f32 0.0, %v204
    %206 = vdwg.mxu0
    %v208 = vsel %vm61, %v48, 0
    %v211 = vsel %vm61, %v59, 0
    %v214 = vsel %vm61, %v60, 0
    %216 = vmatpush.xpose.msra.mxu0 0.0
    %217 = vmatpush.xpose.msra.mxu0 0.0
    %218 = vmatpush.xpose.msra.mxu0 0.0
    %219 = vmatpush.xpose.msra.mxu0 0.0
    %220 = vmatpush.xpose.msra.mxu0 0.0
    %221 = vmatpush.xpose.msra.mxu0 0.0
    %222 = vmatpush.xpose.msra.mxu0 0.0
    %223 = vmatpush.xpose.msra.mxu0 0.0
    %224 = vmatpush.xpose.msra.mxu0 0.0
    %225 = vmatpush.xpose.msra.mxu0 0.0
    %226 = vmatpush.xpose.msra.mxu0 0.0
    %227 = vmatpush.xpose.msra.mxu0 0.0
    %228 = vmatpush.xpose.msra.mxu0 0.0
    %229 = vmatpush.xpose.msra.mxu0 0.0
    %230 = vmatpush.xpose.msra.mxu0 %v214
    %231 = vmatpush.xpose.msra.mxu0 %v211
    %232 = vmatmul.f32.gmra.mxu0 %v208
    %v233 = vpop.f32.mrf.mxu0
    %v234 = vadd.f32 0.0, %v233
    %235 = vdwg.mxu0
    %v236 = vmul.f32 %v43, %v43
    %v237 = vmul.f32 %v44, %v44
    %v238 = vmul.f32 %v45, %v45
    %v239 = vmul.f32 %v46, %v46
    %v240 = vmul.f32 %v47, %v47
    %v241 = vmul.f32 %v48, %v48
    %v242 = vsel %vm61, %v236, 0.0
    %243 = vadd.xlane.f32.xlu0 %v242
    %v244 = vpop.xlane.xlu0 %243
    %v245 = vsel %vm61, %v237, 0.0
    %246 = vadd.xlane.f32.xlu0 %v245
    %v247 = vpop.xlane.xlu0 %246
    %v248 = vsel %vm61, %v238, 0.0
    %249 = vadd.xlane.f32.xlu0 %v248
    %v250 = vpop.xlane.xlu0 %249
    %v251 = vsel %vm61, %v239, 0.0
    %252 = vadd.xlane.f32.xlu0 %v251
    %v253 = vpop.xlane.xlu0 %252
    %v254 = vsel %vm61, %v240, 0.0
    %255 = vadd.xlane.f32.xlu0 %v254
    %v256 = vpop.xlane.xlu0 %255
    %v257 = vsel %vm61, %v241, 0.0
    %258 = vadd.xlane.f32.xlu0 %v257
    %v259 = vpop.xlane.xlu0 %258
    %v260 = vmul.f32 %v49, %v49
    %v261 = vmul.f32 %v50, %v50
    %v262 = vmul.f32 %v51, %v51
    %v263 = vmul.f32 %v52, %v52
    %v264 = vmul.f32 %v53, %v53
    %v265 = vmul.f32 %v54, %v54
    %v266 = vmul.f32 %v55, %v55
    %v267 = vmul.f32 %v56, %v56
    %v268 = vmul.f32 %v57, %v57
    %v269 = vmul.f32 %v58, %v58
    %v270 = vmul.f32 %v59, %v59
    %v271 = vmul.f32 %v60, %v60
    %v272 = vsel %vm61, %v260, 0.0
    %273 = vadd.xlane.f32.xlu0 %v272
    %v274 = vpop.xlane.xlu0 %273
    %v275 = vsel %vm61, %v261, 0.0
    %276 = vadd.xlane.f32.xlu0 %v275
    %v277 = vpop.xlane.xlu0 %276
    %v278 = vsel %vm61, %v262, 0.0
    %279 = vadd.xlane.f32.xlu0 %v278
    %v280 = vpop.xlane.xlu0 %279
    %v281 = vsel %vm61, %v263, 0.0
    %282 = vadd.xlane.f32.xlu0 %v281
    %v283 = vpop.xlane.xlu0 %282
    %v284 = vsel %vm61, %v264, 0.0
    %285 = vadd.xlane.f32.xlu0 %v284
    %v286 = vpop.xlane.xlu0 %285
    %v287 = vsel %vm61, %v265, 0.0
    %288 = vadd.xlane.f32.xlu0 %v287
    %v289 = vpop.xlane.xlu0 %288
    %v290 = vsel %vm61, %v266, 0.0
    %291 = vadd.xlane.f32.xlu0 %v290
    %v292 = vpop.xlane.xlu0 %291
    %v293 = vsel %vm61, %v267, 0.0
    %294 = vadd.xlane.f32.xlu0 %v293
    %v295 = vpop.xlane.xlu0 %294
    %v296 = vsel %vm61, %v268, 0.0
    %297 = vadd.xlane.f32.xlu0 %v296
    %v298 = vpop.xlane.xlu0 %297
    %v299 = vsel %vm61, %v269, 0.0
    %300 = vadd.xlane.f32.xlu0 %v299
    %v301 = vpop.xlane.xlu0 %300
    %v302 = vsel %vm61, %v270, 0.0
    %303 = vadd.xlane.f32.xlu0 %v302
    %v304 = vpop.xlane.xlu0 %303
    %v305 = vsel %vm61, %v271, 0.0
    %306 = vadd.xlane.f32.xlu0 %v305
    %v307 = vpop.xlane.xlu0 %306
    %308 = vxpose.xlu0.b32.start [1/16] %v274, 128
    %309 = vxpose.xlu0.b32.cont [2/16] %v277, 128
    %310 = vxpose.xlu0.b32.cont [3/16] 0.0, 128
    %311 = vxpose.xlu0.b32.cont [4/16] 0.0, 128
    %312 = vxpose.xlu0.b32.cont [5/16] 0.0, 128
    %313 = vxpose.xlu0.b32.cont [6/16] 0.0, 128
    %314 = vxpose.xlu0.b32.cont [7/16] 0.0, 128
    %315 = vxpose.xlu0.b32.cont [8/16] 0.0, 128
    %316 = vxpose.xlu0.b32.cont [9/16] 0.0, 128
    %317 = vxpose.xlu0.b32.cont [10/16] 0.0, 128
    %318 = vxpose.xlu0.b32.cont [11/16] 0.0, 128
    %319 = vxpose.xlu0.b32.cont [12/16] 0.0, 128
    %320 = vxpose.xlu0.b32.cont [13/16] 0.0, 128
    %321 = vxpose.xlu0.b32.cont [14/16] 0.0, 128
    %322 = vxpose.xlu0.b32.cont [15/16] 0.0, 128
    %323 = vxpose.xlu0.b32.end [16/16] 0.0, 128
    %v324 = vpop.trf.xlu0
    %v325 = vpop.trf.xlu0
    %v326 = vpop.trf.xlu0
    %v327 = vpop.trf.xlu0
    %v328 = vpop.trf.xlu0
    %v329 = vpop.trf.xlu0
    %v330 = vpop.trf.xlu0
    %v331 = vpop.trf.xlu0
    %v332 = vpop.trf.xlu0
    %v333 = vpop.trf.xlu0
    %v334 = vpop.trf.xlu0
    %v335 = vpop.trf.xlu0
    %v336 = vpop.trf.xlu0
    %v337 = vpop.trf.xlu0
    %v338 = vpop.trf.xlu0
    %v339 = vpop.trf.xlu0
    %340 = vxpose.xlu0.b32.start [1/16] %v280, 128
    %341 = vxpose.xlu0.b32.cont [2/16] %v283, 128
    %342 = vxpose.xlu0.b32.cont [3/16] 0.0, 128
    %343 = vxpose.xlu0.b32.cont [4/16] 0.0, 128
    %344 = vxpose.xlu0.b32.cont [5/16] 0.0, 128
    %345 = vxpose.xlu0.b32.cont [6/16] 0.0, 128
    %346 = vxpose.xlu0.b32.cont [7/16] 0.0, 128
    %347 = vxpose.xlu0.b32.cont [8/16] 0.0, 128
    %348 = vxpose.xlu0.b32.cont [9/16] 0.0, 128
    %349 = vxpose.xlu0.b32.cont [10/16] 0.0, 128
    %350 = vxpose.xlu0.b32.cont [11/16] 0.0, 128
    %351 = vxpose.xlu0.b32.cont [12/16] 0.0, 128
    %352 = vxpose.xlu0.b32.cont [13/16] 0.0, 128
    %353 = vxpose.xlu0.b32.cont [14/16] 0.0, 128
    %354 = vxpose.xlu0.b32.cont [15/16] 0.0, 128
    %355 = vxpose.xlu0.b32.end [16/16] 0.0, 128
    %v356 = vpop.trf.xlu0
    %v357 = vpop.trf.xlu0
    %v358 = vpop.trf.xlu0
    %v359 = vpop.trf.xlu0
    %v360 = vpop.trf.xlu0
    %v361 = vpop.trf.xlu0
    %v362 = vpop.trf.xlu0
    %v363 = vpop.trf.xlu0
    %v364 = vpop.trf.xlu0
    %v365 = vpop.trf.xlu0
    %v366 = vpop.trf.xlu0
    %v367 = vpop.trf.xlu0
    %v368 = vpop.trf.xlu0
    %v369 = vpop.trf.xlu0
    %v370 = vpop.trf.xlu0
    %v371 = vpop.trf.xlu0
    %372 = vxpose.xlu0.b32.start [1/16] %v286, 128
    %373 = vxpose.xlu0.b32.cont [2/16] %v289, 128
    %374 = vxpose.xlu0.b32.cont [3/16] 0.0, 128
    %375 = vxpose.xlu0.b32.cont [4/16] 0.0, 128
    %376 = vxpose.xlu0.b32.cont [5/16] 0.0, 128
    %377 = vxpose.xlu0.b32.cont [6/16] 0.0, 128
    %378 = vxpose.xlu0.b32.cont [7/16] 0.0, 128
    %379 = vxpose.xlu0.b32.cont [8/16] 0.0, 128
    %380 = vxpose.xlu0.b32.cont [9/16] 0.0, 128
    %381 = vxpose.xlu0.b32.cont [10/16] 0.0, 128
    %382 = vxpose.xlu0.b32.cont [11/16] 0.0, 128
    %383 = vxpose.xlu0.b32.cont [12/16] 0.0, 128
    %384 = vxpose.xlu0.b32.cont [13/16] 0.0, 128
    %385 = vxpose.xlu0.b32.cont [14/16] 0.0, 128
    %386 = vxpose.xlu0.b32.cont [15/16] 0.0, 128
    %387 = vxpose.xlu0.b32.end [16/16] 0.0, 128
    %v388 = vpop.trf.xlu0
    %v389 = vpop.trf.xlu0
    %v390 = vpop.trf.xlu0
    %v391 = vpop.trf.xlu0
    %v392 = vpop.trf.xlu0
    %v393 = vpop.trf.xlu0
    %v394 = vpop.trf.xlu0
    %v395 = vpop.trf.xlu0
    %v396 = vpop.trf.xlu0
    %v397 = vpop.trf.xlu0
    %v398 = vpop.trf.xlu0
    %v399 = vpop.trf.xlu0
    %v400 = vpop.trf.xlu0
    %v401 = vpop.trf.xlu0
    %v402 = vpop.trf.xlu0
    %v403 = vpop.trf.xlu0
    %404 = vxpose.xlu0.b32.start [1/16] %v292, 128
    %405 = vxpose.xlu0.b32.cont [2/16] %v295, 128
    %406 = vxpose.xlu0.b32.cont [3/16] 0.0, 128
    %407 = vxpose.xlu0.b32.cont [4/16] 0.0, 128
    %408 = vxpose.xlu0.b32.cont [5/16] 0.0, 128
    %409 = vxpose.xlu0.b32.cont [6/16] 0.0, 128
    %410 = vxpose.xlu0.b32.cont [7/16] 0.0, 128
    %411 = vxpose.xlu0.b32.cont [8/16] 0.0, 128
    %412 = vxpose.xlu0.b32.cont [9/16] 0.0, 128
    %413 = vxpose.xlu0.b32.cont [10/16] 0.0, 128
    %414 = vxpose.xlu0.b32.cont [11/16] 0.0, 128
    %415 = vxpose.xlu0.b32.cont [12/16] 0.0, 128
    %416 = vxpose.xlu0.b32.cont [13/16] 0.0, 128
    %417 = vxpose.xlu0.b32.cont [14/16] 0.0, 128
    %418 = vxpose.xlu0.b32.cont [15/16] 0.0, 128
    %419 = vxpose.xlu0.b32.end [16/16] 0.0, 128
    %v420 = vpop.trf.xlu0
    %v421 = vpop.trf.xlu0
    %v422 = vpop.trf.xlu0
    %v423 = vpop.trf.xlu0
    %v424 = vpop.trf.xlu0
    %v425 = vpop.trf.xlu0
    %v426 = vpop.trf.xlu0
    %v427 = vpop.trf.xlu0
    %v428 = vpop.trf.xlu0
    %v429 = vpop.trf.xlu0
    %v430 = vpop.trf.xlu0
    %v431 = vpop.trf.xlu0
    %v432 = vpop.trf.xlu0
    %v433 = vpop.trf.xlu0
    %v434 = vpop.trf.xlu0
    %v435 = vpop.trf.xlu0
    %436 = vxpose.xlu0.b32.start [1/16] %v298, 128
    %437 = vxpose.xlu0.b32.cont [2/16] %v301, 128
    %438 = vxpose.xlu0.b32.cont [3/16] 0.0, 128
    %439 = vxpose.xlu0.b32.cont [4/16] 0.0, 128
    %440 = vxpose.xlu0.b32.cont [5/16] 0.0, 128
    %441 = vxpose.xlu0.b32.cont [6/16] 0.0, 128
    %442 = vxpose.xlu0.b32.cont [7/16] 0.0, 128
    %443 = vxpose.xlu0.b32.cont [8/16] 0.0, 128
    %444 = vxpose.xlu0.b32.cont [9/16] 0.0, 128
    %445 = vxpose.xlu0.b32.cont [10/16] 0.0, 128
    %446 = vxpose.xlu0.b32.cont [11/16] 0.0, 128
    %447 = vxpose.xlu0.b32.cont [12/16] 0.0, 128
    %448 = vxpose.xlu0.b32.cont [13/16] 0.0, 128
    %449 = vxpose.xlu0.b32.cont [14/16] 0.0, 128
    %450 = vxpose.xlu0.b32.cont [15/16] 0.0, 128
    %451 = vxpose.xlu0.b32.end [16/16] 0.0, 128
    %v452 = vpop.trf.xlu0
    %v453 = vpop.trf.xlu0
    %v454 = vpop.trf.xlu0
    %v455 = vpop.trf.xlu0
    %v456 = vpop.trf.xlu0
    %v457 = vpop.trf.xlu0
    %v458 = vpop.trf.xlu0
    %v459 = vpop.trf.xlu0
    %v460 = vpop.trf.xlu0
    %v461 = vpop.trf.xlu0
    %v462 = vpop.trf.xlu0
    %v463 = vpop.trf.xlu0
    %v464 = vpop.trf.xlu0
    %v465 = vpop.trf.xlu0
    %v466 = vpop.trf.xlu0
    %v467 = vpop.trf.xlu0
    %468 = vxpose.xlu0.b32.start [1/16] %v304, 128
    %469 = vxpose.xlu0.b32.cont [2/16] %v307, 128
    %470 = vxpose.xlu0.b32.cont [3/16] 0.0, 128
    %471 = vxpose.xlu0.b32.cont [4/16] 0.0, 128
    %472 = vxpose.xlu0.b32.cont [5/16] 0.0, 128
    %473 = vxpose.xlu0.b32.cont [6/16] 0.0, 128
    %474 = vxpose.xlu0.b32.cont [7/16] 0.0, 128
    %475 = vxpose.xlu0.b32.cont [8/16] 0.0, 128
    %476 = vxpose.xlu0.b32.cont [9/16] 0.0, 128
    %477 = vxpose.xlu0.b32.cont [10/16] 0.0, 128
    %478 = vxpose.xlu0.b32.cont [11/16] 0.0, 128
    %479 = vxpose.xlu0.b32.cont [12/16] 0.0, 128
    %480 = vxpose.xlu0.b32.cont [13/16] 0.0, 128
    %481 = vxpose.xlu0.b32.cont [14/16] 0.0, 128
    %482 = vxpose.xlu0.b32.cont [15/16] 0.0, 128
    %483 = vxpose.xlu0.b32.end [16/16] 0.0, 128
    %v484 = vpop.trf.xlu0
    %v485 = vpop.trf.xlu0
    %v486 = vpop.trf.xlu0
    %v487 = vpop.trf.xlu0
    %v488 = vpop.trf.xlu0
    %v489 = vpop.trf.xlu0
    %v490 = vpop.trf.xlu0
    %v491 = vpop.trf.xlu0
    %v492 = vpop.trf.xlu0
    %v493 = vpop.trf.xlu0
    %v494 = vpop.trf.xlu0
    %v495 = vpop.trf.xlu0
    %v496 = vpop.trf.xlu0
    %v497 = vpop.trf.xlu0
    %v498 = vpop.trf.xlu0
    %v499 = vpop.trf.xlu0
    %v500 = vperm.slane %v324, 0
    %v501 = vperm.slane %v356, 0
    %v502 = vperm.slane %v388, 0
    %v503 = vperm.slane %v420, 0
    %v504 = vperm.slane %v452, 0
    %v505 = vperm.slane %v484, 0
    %v506 = vadd.f32 %v244, %v500
    %v507 = vadd.f32 %v247, %v501
    %v508 = vadd.f32 %v250, %v502
    %v509 = vadd.f32 %v253, %v503
    %v510 = vadd.f32 %v256, %v504
    %v511 = vadd.f32 %v259, %v505
    %v512 = vmul.f32 %v89, 2.0
    %v513 = vmul.f32 %v118, 2.0
    %v514 = vmul.f32 %v147, 2.0
    %v515 = vmul.f32 %v176, 2.0
    %v516 = vmul.f32 %v205, 2.0
    %v517 = vmul.f32 %v234, 2.0
    %v518 = vsub.f32 %v506, %v512
    %v519 = vsub.f32 %v507, %v513
    %v520 = vsub.f32 %v508, %v514
    %v521 = vsub.f32 %v509, %v515
    %v522 = vsub.f32 %v510, %v516
    %v523 = vsub.f32 %v511, %v517
    %v524 = vmax.f32 %v518, 0.0
    %v525 = vmax.f32 %v519, 0.0
    %v526 = vmax.f32 %v520, 0.0
    %v527 = vmax.f32 %v521, 0.0
    %v528 = vmax.f32 %v522, 0.0
    %v529 = vmax.f32 %v523, 0.0
    %v530 = vrsqrt.pop %v524
    %v531 = vmul.f32 %v530, %v524
    %v532 = vmul.f32 %v531, %v530
    %v533 = vmul.f32 0.5, %v532
    %v534 = vsub.f32 1.5, %v533
    %v535 = vmul.f32 %v530, %v534
    %v536 = vmul.f32 %v524, %v535
    %vm537 = vcmp.eq.f32.partialorder %v524, inf
    %v538 = vsel %vm537, %v524, %v536
    %vm539 = vcmp.eq.f32.partialorder %v524, 0.0
    %v540 = vand.u32 %v524, 2147483648
    %v541 = vsel %vm539, %v540, %v538
    %v542 = vrsqrt.pop %v525
    %v543 = vmul.f32 %v542, %v525
    %v544 = vmul.f32 %v543, %v542
    %v545 = vmul.f32 0.5, %v544
    %v546 = vsub.f32 1.5, %v545
    %v547 = vmul.f32 %v542, %v546
    %v548 = vmul.f32 %v525, %v547
    %vm549 = vcmp.eq.f32.partialorder %v525, inf
    %v550 = vsel %vm549, %v525, %v548
    %vm551 = vcmp.eq.f32.partialorder %v525, 0.0
    %v552 = vand.u32 %v525, 2147483648
    %v553 = vsel %vm551, %v552, %v550
    %v554 = vrsqrt.pop %v526
    %v555 = vmul.f32 %v554, %v526
    %v556 = vmul.f32 %v555, %v554
    %v557 = vmul.f32 0.5, %v556
    %v558 = vsub.f32 1.5, %v557
    %v559 = vmul.f32 %v554, %v558
    %v560 = vmul.f32 %v526, %v559
    %vm561 = vcmp.eq.f32.partialorder %v526, inf
    %v562 = vsel %vm561, %v526, %v560
    %vm563 = vcmp.eq.f32.partialorder %v526, 0.0
    %v564 = vand.u32 %v526, 2147483648
    %v565 = vsel %vm563, %v564, %v562
    %v566 = vrsqrt.pop %v527
    %v567 = vmul.f32 %v566, %v527
    %v568 = vmul.f32 %v567, %v566
    %v569 = vmul.f32 0.5, %v568
    %v570 = vsub.f32 1.5, %v569
    %v571 = vmul.f32 %v566, %v570
    %v572 = vmul.f32 %v527, %v571
    %vm573 = vcmp.eq.f32.partialorder %v527, inf
    %v574 = vsel %vm573, %v527, %v572
    %vm575 = vcmp.eq.f32.partialorder %v527, 0.0
    %v576 = vand.u32 %v527, 2147483648
    %v577 = vsel %vm575, %v576, %v574
    %v578 = vrsqrt.pop %v528
    %v579 = vmul.f32 %v578, %v528
    %v580 = vmul.f32 %v579, %v578
    %v581 = vmul.f32 0.5, %v580
    %v582 = vsub.f32 1.5, %v581
    %v583 = vmul.f32 %v578, %v582
    %v584 = vmul.f32 %v528, %v583
    %vm585 = vcmp.eq.f32.partialorder %v528, inf
    %v586 = vsel %vm585, %v528, %v584
    %vm587 = vcmp.eq.f32.partialorder %v528, 0.0
    %v588 = vand.u32 %v528, 2147483648
    %v589 = vsel %vm587, %v588, %v586
    %v590 = vrsqrt.pop %v529
    %v591 = vmul.f32 %v590, %v529
    %v592 = vmul.f32 %v591, %v590
    %v593 = vmul.f32 0.5, %v592
    %v594 = vsub.f32 1.5, %v593
    %v595 = vmul.f32 %v590, %v594
    %v596 = vmul.f32 %v529, %v595
    %vm597 = vcmp.eq.f32.partialorder %v529, inf
    %v598 = vsel %vm597, %v529, %v596
    %vm599 = vcmp.eq.f32.partialorder %v529, 0.0
    %v600 = vand.u32 %v529, 2147483648
    %v601 = vsel %vm599, %v600, %v598
    %v602 = vsub.f32 0.0, %v541
    %v603 = vsub.f32 0.0, %v553
    %v604 = vsub.f32 0.0, %v565
    %v605 = vsub.f32 0.0, %v577
    %v606 = vsub.f32 0.0, %v589
    %v607 = vsub.f32 0.0, %v601
    %vm608 = vcmask 130048
    %v609 = vsel %vm608, %v602, -inf
    %610 = vmax.xlane.f32.xlu0 %v609
    %v611 = vpop.xlane.xlu0 %610
    %v612 = vsel %vm608, %v603, -inf
    %613 = vmax.xlane.f32.xlu0 %v612
    %v614 = vpop.xlane.xlu0 %613
    %v615 = vsel %vm608, %v604, -inf
    %616 = vmax.xlane.f32.xlu0 %v615
    %v617 = vpop.xlane.xlu0 %616
    %v618 = vsel %vm608, %v605, -inf
    %619 = vmax.xlane.f32.xlu0 %v618
    %v620 = vpop.xlane.xlu0 %619
    %v621 = vsel %vm608, %v606, -inf
    %622 = vmax.xlane.f32.xlu0 %v621
    %v623 = vpop.xlane.xlu0 %622
    %v624 = vsel %vm608, %v607, -inf
    %625 = vmax.xlane.f32.xlu0 %v624
    %v626 = vpop.xlane.xlu0 %625
    %v627 = vsub.f32 %v602, %v611
    %v628 = vsub.f32 %v603, %v614
    %v629 = vsub.f32 %v604, %v617
    %v630 = vsub.f32 %v605, %v620
    %v631 = vsub.f32 %v606, %v623
    %v632 = vsub.f32 %v607, %v626
    %v633 = vmul.f32 %v627, 1.442695
    %v634 = vpow.pop %v633
    %v635 = vmul.f32 %v628, 1.442695
    %v636 = vpow.pop %v635
    %v637 = vmul.f32 %v629, 1.442695
    %v638 = vpow.pop %v637
    %v639 = vmul.f32 %v630, 1.442695
    %v640 = vpow.pop %v639
    %v641 = vmul.f32 %v631, 1.442695
    %v642 = vpow.pop %v641
    %v643 = vmul.f32 %v632, 1.442695
    %v644 = vpow.pop %v643
    %v645 = vsel %vm608, %v634, 0.0
    %646 = vadd.xlane.f32.xlu0 %v645
    %v647 = vpop.xlane.xlu0 %646
    %v648 = vsel %vm608, %v636, 0.0
    %649 = vadd.xlane.f32.xlu0 %v648
    %v650 = vpop.xlane.xlu0 %649
    %v651 = vsel %vm608, %v638, 0.0
    %652 = vadd.xlane.f32.xlu0 %v651
    %v653 = vpop.xlane.xlu0 %652
    %v654 = vsel %vm608, %v640, 0.0
    %655 = vadd.xlane.f32.xlu0 %v654
    %v656 = vpop.xlane.xlu0 %655
    %v657 = vsel %vm608, %v642, 0.0
    %658 = vadd.xlane.f32.xlu0 %v657
    %v659 = vpop.xlane.xlu0 %658
    %v660 = vsel %vm608, %v644, 0.0
    %661 = vadd.xlane.f32.xlu0 %v660
    %v662 = vpop.xlane.xlu0 %661
    %v663 = vrcp.pop %v647
    %v664 = vmul.f32 %v647, %v663
    %v665 = vsub.f32 1.0, %v664
    %v666 = vmul.f32 %v663, %v665
    %v667 = vadd.f32 %v663, %v666
    %vm668 = vweird.f32 %v647
    %vm669 = vweird.f32 %v663
    %vm670 = vmor %vm668, %vm669
    %v671 = vsel %vm670, %v663, %v667
    %v672 = vand.u32 2147483647, %v647
    %vm673 = vcmp.eq.f32.partialorder %v672, 8.507059e+37
    %v674 = vand.u32 %v647, 2147483648
    %v675 = vor.u32 1.1754944e-38, %v674
    %v676 = vsel %vm673, %v675, %v671
    %v677 = vmul.f32 1.0, %v676
    %v678 = vrcp.pop %v650
    %v679 = vmul.f32 %v650, %v678
    %v680 = vsub.f32 1.0, %v679
    %v681 = vmul.f32 %v678, %v680
    %v682 = vadd.f32 %v678, %v681
    %vm683 = vweird.f32 %v650
    %vm684 = vweird.f32 %v678
    %vm685 = vmor %vm683, %vm684
    %v686 = vsel %vm685, %v678, %v682
    %v687 = vand.u32 2147483647, %v650
    %vm688 = vcmp.eq.f32.partialorder %v687, 8.507059e+37
    %v689 = vand.u32 %v650, 2147483648
    %v690 = vor.u32 1.1754944e-38, %v689
    %v691 = vsel %vm688, %v690, %v686
    %v692 = vmul.f32 1.0, %v691
    %v693 = vrcp.pop %v653
    %v694 = vmul.f32 %v653, %v693
    %v695 = vsub.f32 1.0, %v694
    %v696 = vmul.f32 %v693, %v695
    %v697 = vadd.f32 %v693, %v696
    %vm698 = vweird.f32 %v653
    %vm699 = vweird.f32 %v693
    %vm700 = vmor %vm698, %vm699
    %v701 = vsel %vm700, %v693, %v697
    %v702 = vand.u32 2147483647, %v653
    %vm703 = vcmp.eq.f32.partialorder %v702, 8.507059e+37
    %v704 = vand.u32 %v653, 2147483648
    %v705 = vor.u32 1.1754944e-38, %v704
    %v706 = vsel %vm703, %v705, %v701
    %v707 = vmul.f32 1.0, %v706
    %v708 = vrcp.pop %v656
    %v709 = vmul.f32 %v656, %v708
    %v710 = vsub.f32 1.0, %v709
    %v711 = vmul.f32 %v708, %v710
    %v712 = vadd.f32 %v708, %v711
    %vm713 = vweird.f32 %v656
    %vm714 = vweird.f32 %v708
    %vm715 = vmor %vm713, %vm714
    %v716 = vsel %vm715, %v708, %v712
    %v717 = vand.u32 2147483647, %v656
    %vm718 = vcmp.eq.f32.partialorder %v717, 8.507059e+37
    %v719 = vand.u32 %v656, 2147483648
    %v720 = vor.u32 1.1754944e-38, %v719
    %v721 = vsel %vm718, %v720, %v716
    %v722 = vmul.f32 1.0, %v721
    %v723 = vrcp.pop %v659
    %v724 = vmul.f32 %v659, %v723
    %v725 = vsub.f32 1.0, %v724
    %v726 = vmul.f32 %v723, %v725
    %v727 = vadd.f32 %v723, %v726
    %vm728 = vweird.f32 %v659
    %vm729 = vweird.f32 %v723
    %vm730 = vmor %vm728, %vm729
    %v731 = vsel %vm730, %v723, %v727
    %v732 = vand.u32 2147483647, %v659
    %vm733 = vcmp.eq.f32.partialorder %v732, 8.507059e+37
    %v734 = vand.u32 %v659, 2147483648
    %v735 = vor.u32 1.1754944e-38, %v734
    %v736 = vsel %vm733, %v735, %v731
    %v737 = vmul.f32 1.0, %v736
    %v738 = vrcp.pop %v662
    %v739 = vmul.f32 %v662, %v738
    %v740 = vsub.f32 1.0, %v739
    %v741 = vmul.f32 %v738, %v740
    %v742 = vadd.f32 %v738, %v741
    %vm743 = vweird.f32 %v662
    %vm744 = vweird.f32 %v738
    %vm745 = vmor %vm743, %vm744
    %v746 = vsel %vm745, %v738, %v742
    %v747 = vand.u32 2147483647, %v662
    %vm748 = vcmp.eq.f32.partialorder %v747, 8.507059e+37
    %v749 = vand.u32 %v662, 2147483648
    %v750 = vor.u32 1.1754944e-38, %v749
    %v751 = vsel %vm748, %v750, %v746
    %v752 = vmul.f32 1.0, %v751
    %v753 = vrot.slane %v677, 4
    %v754 = vadd.f32 %v677, %v753
    %v755 = vrot.slane %v754, 2
    %v756 = vadd.f32 %v754, %v755
    %v757 = vrot.slane %v756, 1
    %v758 = vadd.f32 %v756, %v757
    %v759 = vrot.slane %v692, 4
    %v760 = vadd.f32 %v692, %v759
    %v761 = vrot.slane %v760, 2
    %v762 = vadd.f32 %v760, %v761
    %v763 = vrot.slane %v762, 1
    %v764 = vadd.f32 %v762, %v763
    %v765 = vrot.slane %v707, 4
    %v766 = vadd.f32 %v707, %v765
    %v767 = vrot.slane %v766, 2
    %v768 = vadd.f32 %v766, %v767
    %v769 = vrot.slane %v768, 1
    %v770 = vadd.f32 %v768, %v769
    %v771 = vrot.slane %v722, 4
    %v772 = vadd.f32 %v722, %v771
    %v773 = vrot.slane %v772, 2
    %v774 = vadd.f32 %v772, %v773
    %v775 = vrot.slane %v774, 1
    %v776 = vadd.f32 %v774, %v775
    %v777 = vrot.slane %v737, 4
    %v778 = vadd.f32 %v737, %v777
    %v779 = vrot.slane %v778, 2
    %v780 = vadd.f32 %v778, %v779
    %v781 = vrot.slane %v780, 1
    %v782 = vadd.f32 %v780, %v781
    %v783 = vrot.slane %v752, 4
    %v784 = vadd.f32 %v752, %v783
    %v785 = vrot.slane %v784, 2
    %v786 = vadd.f32 %v784, %v785
    %v787 = vrot.slane %v786, 1
    %v788 = vadd.f32 %v786, %v787
    %v789 = vrot.slane %v609, 4
    %v790 = vmax.f32 %v609, %v789
    %v791 = vrot.slane %v790, 2
    %v792 = vmax.f32 %v790, %v791
    %v793 = vrot.slane %v792, 1
    %v794 = vmax.f32 %v792, %v793
    %v795 = vrot.slane %v612, 4
    %v796 = vmax.f32 %v612, %v795
    %v797 = vrot.slane %v796, 2
    %v798 = vmax.f32 %v796, %v797
    %v799 = vrot.slane %v798, 1
    %v800 = vmax.f32 %v798, %v799
    %v801 = vrot.slane %v615, 4
    %v802 = vmax.f32 %v615, %v801
    %v803 = vrot.slane %v802, 2
    %v804 = vmax.f32 %v802, %v803
    %v805 = vrot.slane %v804, 1
    %v806 = vmax.f32 %v804, %v805
    %v807 = vrot.slane %v618, 4
    %v808 = vmax.f32 %v618, %v807
    %v809 = vrot.slane %v808, 2
    %v810 = vmax.f32 %v808, %v809
    %v811 = vrot.slane %v810, 1
    %v812 = vmax.f32 %v810, %v811
    %v813 = vrot.slane %v621, 4
    %v814 = vmax.f32 %v621, %v813
    %v815 = vrot.slane %v814, 2
    %v816 = vmax.f32 %v814, %v815
    %v817 = vrot.slane %v816, 1
    %v818 = vmax.f32 %v816, %v817
    %v819 = vrot.slane %v624, 4
    %v820 = vmax.f32 %v624, %v819
    %v821 = vrot.slane %v820, 2
    %v822 = vmax.f32 %v820, %v821
    %v823 = vrot.slane %v822, 1
    %v824 = vmax.f32 %v822, %v823
    %v825 = vsub.f32 %v602, %v794
    %v826 = vsub.f32 %v603, %v800
    %v827 = vsub.f32 %v604, %v806
    %v828 = vsub.f32 %v605, %v812
    %v829 = vsub.f32 %v606, %v818
    %v830 = vsub.f32 %v607, %v824
    %v831 = vmul.f32 %v825, 1.442695
    %v832 = vpow.pop %v831
    %v833 = vmul.f32 %v826, 1.442695
    %v834 = vpow.pop %v833
    %v835 = vmul.f32 %v827, 1.442695
    %v836 = vpow.pop %v835
    %v837 = vmul.f32 %v828, 1.442695
    %v838 = vpow.pop %v837
    %v839 = vmul.f32 %v829, 1.442695
    %v840 = vpow.pop %v839
    %v841 = vmul.f32 %v830, 1.442695
    %v842 = vpow.pop %v841
    %v843 = vsel %vm608, %v832, 0.0
    %v844 = vrot.slane %v843, 4
    %v845 = vadd.f32 %v843, %v844
    %v846 = vrot.slane %v845, 2
    %v847 = vadd.f32 %v845, %v846
    %v848 = vrot.slane %v847, 1
    %v849 = vadd.f32 %v847, %v848
    %v850 = vsel %vm608, %v834, 0.0
    %v851 = vrot.slane %v850, 4
    %v852 = vadd.f32 %v850, %v851
    %v853 = vrot.slane %v852, 2
    %v854 = vadd.f32 %v852, %v853
    %v855 = vrot.slane %v854, 1
    %v856 = vadd.f32 %v854, %v855
    %v857 = vsel %vm608, %v836, 0.0
    %v858 = vrot.slane %v857, 4
    %v859 = vadd.f32 %v857, %v858
    %v860 = vrot.slane %v859, 2
    %v861 = vadd.f32 %v859, %v860
    %v862 = vrot.slane %v861, 1
    %v863 = vadd.f32 %v861, %v862
    %v864 = vsel %vm608, %v838, 0.0
    %v865 = vrot.slane %v864, 4
    %v866 = vadd.f32 %v864, %v865
    %v867 = vrot.slane %v866, 2
    %v868 = vadd.f32 %v866, %v867
    %v869 = vrot.slane %v868, 1
    %v870 = vadd.f32 %v868, %v869
    %v871 = vsel %vm608, %v840, 0.0
    %v872 = vrot.slane %v871, 4
    %v873 = vadd.f32 %v871, %v872
    %v874 = vrot.slane %v873, 2
    %v875 = vadd.f32 %v873, %v874
    %v876 = vrot.slane %v875, 1
    %v877 = vadd.f32 %v875, %v876
    %v878 = vsel %vm608, %v842, 0.0
    %v879 = vrot.slane %v878, 4
    %v880 = vadd.f32 %v878, %v879
    %v881 = vrot.slane %v880, 2
    %v882 = vadd.f32 %v880, %v881
    %v883 = vrot.slane %v882, 1
    %v884 = vadd.f32 %v882, %v883
    %v885 = vrcp.pop %v849
    %v886 = vmul.f32 %v849, %v885
    %v887 = vsub.f32 1.0, %v886
    %v888 = vmul.f32 %v885, %v887
    %v889 = vadd.f32 %v885, %v888
    %vm890 = vweird.f32 %v849
    %vm891 = vweird.f32 %v885
    %vm892 = vmor %vm890, %vm891
    %v893 = vsel %vm892, %v885, %v889
    %v894 = vand.u32 2147483647, %v849
    %vm895 = vcmp.eq.f32.partialorder %v894, 8.507059e+37
    %v896 = vand.u32 %v849, 2147483648
    %v897 = vor.u32 1.1754944e-38, %v896
    %v898 = vsel %vm895, %v897, %v893
    %v899 = vmul.f32 1.0, %v898
    %v900 = vrcp.pop %v856
    %v901 = vmul.f32 %v856, %v900
    %v902 = vsub.f32 1.0, %v901
    %v903 = vmul.f32 %v900, %v902
    %v904 = vadd.f32 %v900, %v903
    %vm905 = vweird.f32 %v856
    %vm906 = vweird.f32 %v900
    %vm907 = vmor %vm905, %vm906
    %v908 = vsel %vm907, %v900, %v904
    %v909 = vand.u32 2147483647, %v856
    %vm910 = vcmp.eq.f32.partialorder %v909, 8.507059e+37
    %v911 = vand.u32 %v856, 2147483648
    %v912 = vor.u32 1.1754944e-38, %v911
    %v913 = vsel %vm910, %v912, %v908
    %v914 = vmul.f32 1.0, %v913
    %v915 = vrcp.pop %v863
    %v916 = vmul.f32 %v863, %v915
    %v917 = vsub.f32 1.0, %v916
    %v918 = vmul.f32 %v915, %v917
    %v919 = vadd.f32 %v915, %v918
    %vm920 = vweird.f32 %v863
    %vm921 = vweird.f32 %v915
    %vm922 = vmor %vm920, %vm921
    %v923 = vsel %vm922, %v915, %v919
    %v924 = vand.u32 2147483647, %v863
    %vm925 = vcmp.eq.f32.partialorder %v924, 8.507059e+37
    %v926 = vand.u32 %v863, 2147483648
    %v927 = vor.u32 1.1754944e-38, %v926
    %v928 = vsel %vm925, %v927, %v923
    %v929 = vmul.f32 1.0, %v928
    %v930 = vrcp.pop %v870
    %v931 = vmul.f32 %v870, %v930
    %v932 = vsub.f32 1.0, %v931
    %v933 = vmul.f32 %v930, %v932
    %v934 = vadd.f32 %v930, %v933
    %vm935 = vweird.f32 %v870
    %vm936 = vweird.f32 %v930
    %vm937 = vmor %vm935, %vm936
    %v938 = vsel %vm937, %v930, %v934
    %v939 = vand.u32 2147483647, %v870
    %vm940 = vcmp.eq.f32.partialorder %v939, 8.507059e+37
    %v941 = vand.u32 %v870, 2147483648
    %v942 = vor.u32 1.1754944e-38, %v941
    %v943 = vsel %vm940, %v942, %v938
    %v944 = vmul.f32 1.0, %v943
    %v945 = vrcp.pop %v877
    %v946 = vmul.f32 %v877, %v945
    %v947 = vsub.f32 1.0, %v946
    %v948 = vmul.f32 %v945, %v947
    %v949 = vadd.f32 %v945, %v948
    %vm950 = vweird.f32 %v877
    %vm951 = vweird.f32 %v945
    %vm952 = vmor %vm950, %vm951
    %v953 = vsel %vm952, %v945, %v949
    %v954 = vand.u32 2147483647, %v877
    %vm955 = vcmp.eq.f32.partialorder %v954, 8.507059e+37
    %v956 = vand.u32 %v877, 2147483648
    %v957 = vor.u32 1.1754944e-38, %v956
    %v958 = vsel %vm955, %v957, %v953
    %v959 = vmul.f32 1.0, %v958
    %v960 = vrcp.pop %v884
    %v961 = vmul.f32 %v884, %v960
    %v962 = vsub.f32 1.0, %v961
    %v963 = vmul.f32 %v960, %v962
    %v964 = vadd.f32 %v960, %v963
    %vm965 = vweird.f32 %v884
    %vm966 = vweird.f32 %v960
    %vm967 = vmor %vm965, %vm966
    %v968 = vsel %vm967, %v960, %v964
    %v969 = vand.u32 2147483647, %v884
    %vm970 = vcmp.eq.f32.partialorder %v969, 8.507059e+37
    %v971 = vand.u32 %v884, 2147483648
    %v972 = vor.u32 1.1754944e-38, %v971
    %v973 = vsel %vm970, %v972, %v968
    %v974 = vmul.f32 1.0, %v973
    %v975 = vsel %vm608, %v899, 0.0
    %976 = vadd.xlane.f32.xlu0 %v975
    %v977 = vpop.xlane.xlu0 %976
    %v978 = vsel %vm608, %v914, 0.0
    %979 = vadd.xlane.f32.xlu0 %v978
    %v980 = vpop.xlane.xlu0 %979
    %v981 = vsel %vm608, %v929, 0.0
    %982 = vadd.xlane.f32.xlu0 %v981
    %v983 = vpop.xlane.xlu0 %982
    %v984 = vsel %vm608, %v944, 0.0
    %985 = vadd.xlane.f32.xlu0 %v984
    %v986 = vpop.xlane.xlu0 %985
    %v987 = vsel %vm608, %v959, 0.0
    %988 = vadd.xlane.f32.xlu0 %v987
    %v989 = vpop.xlane.xlu0 %988
    %v990 = vsel %vm608, %v974, 0.0
    %991 = vadd.xlane.f32.xlu0 %v990
    %v992 = vpop.xlane.xlu0 %991
    %v993 = vsub.f32 16.0, %v758
    %v994 = vsub.f32 16.0, %v764
    %v995 = vsub.f32 16.0, %v770
    %v996 = vsub.f32 16.0, %v776
    %v997 = vsub.f32 16.0, %v782
    %v998 = vsub.f32 16.0, %v788
    %v999 = vsub.f32 %v993, %v977
    %v1000 = vsub.f32 %v994, %v980
    %v1001 = vsub.f32 %v995, %v983
    %v1002 = vsub.f32 %v996, %v986
    %v1003 = vsub.f32 %v997, %v989
    %v1004 = vsub.f32 %v998, %v992
    %vm1011 = vcmask 1041409
    %v1012 = vsel %vm1011, %v1000, %v999
    %vm1013 = vcmask 1042434
    %v1014 = vsel %vm1013, %v1001, %v1012
    %vm1015 = vcmask 1043459
    %v1016 = vsel %vm1015, %v1002, %v1014
    %vm1017 = vcmask 1044484
    %v1018 = vsel %vm1017, %v1003, %v1016
    %vm1019 = vcmask 1045509
    %v1020 = vsel %vm1019, %v1004, %v1018
    %vm1022 = vcmask 5120
    %1023 = vst.msk [vmem:[%s2] sm:$0x3f] %vm1022, %v1020
    // Predicated region
    $region18: #{tpu_custom_call.1} parent=1 // pred_check
      _
    $region19: #{tpu_custom_call.1} parent=1 // pred_check_branch
      %1025 = sbr.rel (0) target = $region21
    $region20: #{tpu_custom_call.1} parent=1 // pred_region
      _
    $region21: #{tpu_custom_call.1} parent=1 // pred_fallthru
      _
    // Predicated region
    $region22: #{tpu_custom_call.1} parent=1 // pred_check
      _
    $region23: #{tpu_custom_call.1} parent=1 // pred_check_branch
      %1027 = sbr.rel (0) target = $region25
    $region24: #{tpu_custom_call.1} parent=1 // pred_region
      _
    $region25: #{tpu_custom_call.1} parent=1 // pred_fallthru
      _
    %1028 = vsyncpa [#allocation3], 1
    %1029 = vsyncpa [#allocation5], 1

</llo_original>
